<compile_context>
chip_gen: v6e
topology: v6e:2x2x1
jax: 0.10.0
libtpu: 0.0.40
codegen_flags: <defaults>
</compile_context>

<pallas_src>
import functools

import jax
import jax.numpy as jnp
from jax.experimental import pallas as pl
from jax.experimental.pallas import tpu as pltpu


# ----------------------------------------------------------------------------
# Pallas kernel: fused LayerNorm(K) + (x_norm @ W)  (bias-free reduction)
# ----------------------------------------------------------------------------
def _ln_matmul_kernel(x_ref, g_ref, b_ref, w_ref, o_ref, *, eps):
    # x_ref: (tm, K)   g_ref/b_ref: (1, K)   w_ref: (K, Npad)   o_ref: (tm, Npad)
    x = x_ref[...].astype(jnp.float32)
    mean = jnp.mean(x, axis=-1, keepdims=True)
    xc = x - mean
    var = jnp.mean(xc * xc, axis=-1, keepdims=True)
    xn = xc * jax.lax.rsqrt(var + eps) * g_ref[...] + b_ref[...]
    o_ref[...] = jnp.dot(
        xn.astype(w_ref.dtype), w_ref[...], preferred_element_type=jnp.float32
    ).astype(o_ref.dtype)


def _pick_tm(m):
    """Row tile: multiple of 8, capped at 512, and >= 2 grid blocks when possible."""
    for tm in (512, 256, 128, 64, 32, 16, 8):
        if 2 * tm <= m:
            return tm
    return 8  # tiny M; rows get padded up to 8


def layernorm_matmul(x, gamma, beta, w, *, eps=1e-5, compute_dtype=None):
    """y = LayerNorm(x; gamma, beta) @ w   computed in a Pallas kernel.

    x: (M, K), gamma/beta: (K,), w: (K, N).  N is zero-padded to a multiple of
    128 (lane-dense output stores) and M is zero-padded to a multiple of the
    row tile; both pads are sliced off the result.
    """
    M, K = x.shape
    K2, N = w.shape
    assert K == K2, (K, K2)
    out_dtype = x.dtype

    # Lane-dense output: pad N up to a multiple of 128 with zero weight cols.
    n_pad = (-N) % 128
    if n_pad:
        w = jnp.pad(w, ((0, 0), (0, n_pad)))
    Np = N + n_pad

    # Row tiling (never a whole-M single block for large M).
    tm = _pick_tm(M)
    m_pad = (-M) % tm
    if m_pad:
        x = jnp.pad(x, ((0, m_pad), (0, 0)))
    Mp = M + m_pad

    # Optional reduced-precision inputs; LN + accumulation stay in f32.
    if compute_dtype is not None:
        x = x.astype(compute_dtype)
        w = w.astype(compute_dtype)
    in_bytes = jnp.dtype(compute_dtype if compute_dtype is not None else out_dtype).itemsize
    out_bytes = jnp.dtype(out_dtype).itemsize

    gamma2 = gamma.reshape(1, K).astype(jnp.float32)
    beta2 = beta.reshape(1, K).astype(jnp.float32)

    cost = pl.CostEstimate(
        flops=2 * Mp * K * Np + 8 * Mp * K,
        transcendentals=Mp,
        bytes_accessed=(Mp * K + K * Np) * in_bytes + Mp * Np * out_bytes + 2 * K * 4,
    )

    out = pl.pallas_call(
        functools.partial(_ln_matmul_kernel, eps=eps),
        out_shape=jax.ShapeDtypeStruct((Mp, Np), out_dtype),
        grid=(Mp // tm,),
        in_specs=[
            pl.BlockSpec((tm, K), lambda i: (i, 0)),
            pl.BlockSpec((1, K), lambda i: (0, 0)),
            pl.BlockSpec((1, K), lambda i: (0, 0)),
            pl.BlockSpec((K, Np), lambda i: (0, 0)),
        ],
        out_specs=pl.BlockSpec((tm, Np), lambda i: (i, 0)),
        compiler_params=pltpu.CompilerParams(dimension_semantics=("parallel",)),
        cost_estimate=cost,
    )(x, gamma2, beta2, w)

    return out[:M, :N]


# ----------------------------------------------------------------------------
# PatchMerging forward (gather/concat relayout in XLA, LN+matmul in Pallas)
# ----------------------------------------------------------------------------
def _merge_2x2(x, H, W):
    """(B, H*W, C) -> (B*(H/2)*(W/2), 4C), PyTorch cat order [x0, x1, x2, x3]."""
    # TODO(synk): the strided 2x2 gather stays in XLA; fusing it into the
    # kernel's DMA needs an index_map over interleaved strides that BlockSpec
    # cannot express without a padded small-trailing-dim layout.
    B, L, C = x.shape
    x = x.reshape(B, H // 2, 2, W // 2, 2, C)          # (B, H2, hp, W2, wp, C)
    x = x.transpose(0, 1, 3, 4, 2, 5)                  # (B, H2, W2, wp, hp, C)
    # channel index = (2*wp + hp)*C + c  ==  cat([x0, x1, x2, x3], -1)
    return x.reshape(B * (H // 2) * (W // 2), 4 * C)


def patch_merging_forward(x, params, *, input_resolution, eps=1e-5,
                          compute_dtype=None):
    H, W = input_resolution
    B, L, C = x.shape
    assert L == H * W, "input feature has wrong size"
    assert H % 2 == 0 and W % 2 == 0, f"x size ({H}*{W}) are not even."

    x_cat = _merge_2x2(x, H, W)                               # (M, 4C)
    # PyTorch Linear(4C, 2C, bias=False): y = x @ W.T, W: (2C, 4C)
    y = layernorm_matmul(
        x_cat, params["norm_gamma"], params["norm_beta"],
        params["reduction_w"].T, eps=eps, compute_dtype=compute_dtype,
    )
    return y.reshape(B, (H // 2) * (W // 2), 2 * C)


# ----------------------------------------------------------------------------
# Pure-JAX reference (independent construction, mirrors the PyTorch forward)
# ----------------------------------------------------------------------------
def _reference_patch_merging(x, params, input_resolution, eps=1e-5):
    H, W = input_resolution
    B, L, C = x.shape
    xr = x.reshape(B, H, W, C)
    x0 = xr[:, 0::2, 0::2, :]
    x1 = xr[:, 1::2, 0::2, :]
    x2 = xr[:, 0::2, 1::2, :]
    x3 = xr[:, 1::2, 1::2, :]
    xc = jnp.concatenate([x0, x1, x2, x3], axis=-1).reshape(B, -1, 4 * C)
    mean = xc.mean(-1, keepdims=True)
    var = ((xc - mean) ** 2).mean(-1, keepdims=True)
    xn = (xc - mean) / jnp.sqrt(var + eps) * params["norm_gamma"] + params["norm_beta"]
    return xn @ params["reduction_w"].T


if __name__ == "__main__":
    # Small config consistent with the module: input_resolution=(16, 16),
    # dim=32, batch=2  ->  x: (2, 256, 32), output: (2, 64, 64).
    B, H, W, dim = 2, 16, 16, 32
    key = jax.random.PRNGKey(0)
    kx, kg, kb, kw = jax.random.split(key, 4)
    x = jax.random.normal(kx, (B, H * W, dim), dtype=jnp.float32)
    params = {
        # nn.LayerNorm(4*dim): weight/bias (perturbed from 1/0 to exercise affine)
        "norm_gamma": (1.0 + 0.02 * jax.random.normal(kg, (4 * dim,))).astype(jnp.float32),
        "norm_beta": (0.02 * jax.random.normal(kb, (4 * dim,))).astype(jnp.float32),
        # nn.Linear(4*dim, 2*dim, bias=False).weight: (2*dim, 4*dim)
        "reduction_w": (0.02 * jax.random.normal(kw, (2 * dim, 4 * dim))).astype(jnp.float32),
    }

    # f32 path (exact-tolerance check).
    y_f32 = patch_merging_forward(x, params, input_resolution=(H, W))
    y_f32 = jax.block_until_ready(y_f32)

    # bf16-input path (f32 LN + f32 MXU accumulation), looser tolerance.
    y_bf16 = patch_merging_forward(x, params, input_resolution=(H, W),
                                   compute_dtype=jnp.bfloat16)
    y_bf16 = jax.block_until_ready(y_bf16)

    ref = _reference_patch_merging(x, params, (H, W))

    assert y_f32.shape == (B, (H // 2) * (W // 2), 2 * dim), y_f32.shape
    assert jnp.allclose(y_f32, ref, atol=2e-4, rtol=2e-4), \
        float(jnp.max(jnp.abs(y_f32 - ref)))
    assert jnp.allclose(y_bf16.astype(jnp.float32), ref, atol=5e-2, rtol=5e-2), \
        float(jnp.max(jnp.abs(y_bf16.astype(jnp.float32) - ref)))

    print("KERNEL_OK")
</pallas_src>

<mosaic_0001>
module attributes {stable_mosaic.version = 11 : i64} {
  func.func @_ln_matmul_kernel(%arg0: i32, %arg1: memref<64x128xf32, #tpu.memory_space<vmem>>, %arg2: memref<1x128xf32, #tpu.memory_space<vmem>>, %arg3: memref<1x128xf32, #tpu.memory_space<vmem>>, %arg4: memref<128x128xf32, #tpu.memory_space<vmem>>, %arg5: memref<64x128xf32, #tpu.memory_space<vmem>>) attributes {dimension_semantics = [#tpu.dimension_semantics<parallel>], iteration_bounds = array<i64: 2>, scalar_prefetch = 0 : i64, scratch_operands = 0 : i64, tpu.core_type = #tpu.core_type<tc>, window_params = [{transform_indices = @transform_0, window_bounds = array<i64: 64, 128>}, {pipeline_mode = #tpu.pipeline_mode<synchronous>, transform_indices = @transform_1, window_bounds = array<i64: 1, 128>}, {pipeline_mode = #tpu.pipeline_mode<synchronous>, transform_indices = @transform_2, window_bounds = array<i64: 1, 128>}, {pipeline_mode = #tpu.pipeline_mode<synchronous>, transform_indices = @transform_3, window_bounds = array<i64: 128, 128>}, {transform_indices = @transform_4, window_bounds = array<i64: 64, 128>}]} {
    %c0 = arith.constant 0 : index
    %c0_0 = arith.constant 0 : index
    %0 = vector.load %arg1[%c0, %c0_0] : memref<64x128xf32, #tpu.memory_space<vmem>>, vector<64x128xf32>
    %cst = arith.constant dense<0.000000e+00> : vector<64xf32>
    %1 = vector.multi_reduction <add>, %0, %cst [1] : vector<64x128xf32> to vector<64xf32>
    %2 = vector.shape_cast %1 : vector<64xf32> to vector<64x1xf32>
    %cst_1 = arith.constant 1.280000e+02 : f32
    %3 = vector.broadcast %cst_1 : f32 to vector<64x1xf32>
    %4 = arith.divf %2, %3 : vector<64x1xf32>
    %5 = vector.broadcast %4 : vector<64x1xf32> to vector<64x128xf32>
    %6 = arith.subf %0, %5 : vector<64x128xf32>
    %7 = arith.mulf %6, %6 : vector<64x128xf32>
    %cst_2 = arith.constant dense<0.000000e+00> : vector<64xf32>
    %8 = vector.multi_reduction <add>, %7, %cst_2 [1] : vector<64x128xf32> to vector<64xf32>
    %9 = vector.shape_cast %8 : vector<64xf32> to vector<64x1xf32>
    %cst_3 = arith.constant 1.280000e+02 : f32
    %10 = vector.broadcast %cst_3 : f32 to vector<64x1xf32>
    %11 = arith.divf %9, %10 : vector<64x1xf32>
    %cst_4 = arith.constant 9.99999974E-6 : f32
    %12 = vector.broadcast %cst_4 : f32 to vector<64x1xf32>
    %13 = arith.addf %11, %12 : vector<64x1xf32>
    %14 = math.rsqrt %13 : vector<64x1xf32>
    %15 = vector.broadcast %14 : vector<64x1xf32> to vector<64x128xf32>
    %16 = arith.mulf %6, %15 : vector<64x128xf32>
    %c0_5 = arith.constant 0 : index
    %c0_6 = arith.constant 0 : index
    %17 = vector.load %arg2[%c0_5, %c0_6] : memref<1x128xf32, #tpu.memory_space<vmem>>, vector<1x128xf32>
    %18 = vector.broadcast %17 : vector<1x128xf32> to vector<64x128xf32>
    %19 = arith.mulf %16, %18 : vector<64x128xf32>
    %c0_7 = arith.constant 0 : index
    %c0_8 = arith.constant 0 : index
    %20 = vector.load %arg3[%c0_7, %c0_8] : memref<1x128xf32, #tpu.memory_space<vmem>>, vector<1x128xf32>
    %21 = vector.broadcast %20 : vector<1x128xf32> to vector<64x128xf32>
    %22 = arith.addf %19, %21 : vector<64x128xf32>
    %c0_9 = arith.constant 0 : index
    %c0_10 = arith.constant 0 : index
    %23 = vector.load %arg4[%c0_9, %c0_10] : memref<128x128xf32, #tpu.memory_space<vmem>>, vector<128x128xf32>
    %cst_11 = arith.constant dense<0.000000e+00> : vector<64x128xf32>
    %24 = tpu.matmul %22, %23, %cst_11 {dimension_numbers = #tpu.dot_dimension_numbers<[1], [0], [0], [1], [0, 0, 1, 1], [], []>} : vector<64x128xf32>, vector<128x128xf32>, vector<64x128xf32> -> vector<64x128xf32>
    %c0_12 = arith.constant 0 : index
    %c0_13 = arith.constant 0 : index
    %25 = vector.load %arg5[%c0_12, %c0_13] : memref<64x128xf32, #tpu.memory_space<vmem>>, vector<64x128xf32>
    tpu.vector_store %arg5[%c0_12, %c0_13], %24 {strides = array<i32>} : memref<64x128xf32, #tpu.memory_space<vmem>>, vector<64x128xf32>,
    return
  }
  func.func @transform_0(%arg0: i32) -> (i32, i32) {
    %c0_i32 = arith.constant 0 : i32
    %c0_i32_0 = arith.constant 0 : i32
    return %arg0, %c0_i32 : i32, i32
  }
  func.func @transform_1(%arg0: i32) -> (i32, i32) {
    %c0_i32 = arith.constant 0 : i32
    %c0_i32_0 = arith.constant 0 : i32
    %c0_i32_1 = arith.constant 0 : i32
    return %c0_i32, %c0_i32_0 : i32, i32
  }
  func.func @transform_2(%arg0: i32) -> (i32, i32) {
    %c0_i32 = arith.constant 0 : i32
    %c0_i32_0 = arith.constant 0 : i32
    %c0_i32_1 = arith.constant 0 : i32
    return %c0_i32, %c0_i32_0 : i32, i32
  }
  func.func @transform_3(%arg0: i32) -> (i32, i32) {
    %c0_i32 = arith.constant 0 : i32
    %c0_i32_0 = arith.constant 0 : i32
    %c0_i32_1 = arith.constant 0 : i32
    return %c0_i32, %c0_i32_0 : i32, i32
  }
  func.func @transform_4(%arg0: i32) -> (i32, i32) {
    %c0_i32 = arith.constant 0 : i32
    %c0_i32_0 = arith.constant 0 : i32
    return %arg0, %c0_i32 : i32, i32
  }
}

</mosaic_0001>

<llo_original>
// kernel: tpu_custom_call.1
$region0: #{tpu_custom_call.1}
  #allocation0 [shape = 'u32[]', space=smem, size = 0x4, offset = 0x4, fixed_abs, tag = 'smem constant byte address 0x4 - core index']
  #allocation1 [shape = 'u32[144,128]{1,0:T(1,128)}', space=vmem, size = 0x12000, scoped, tag = 'internal scratch']
  %s0 = inlined_call_operand.hbm [shape: f32[128,128], index: 0, kind: input, shape index: {}]
  %s1 = inlined_call_operand.vmem [shape: f32[1,128], index: 1, kind: input, shape index: {}]
  %s2 = inlined_call_operand.vmem [shape: f32[1,128], index: 2, kind: input, shape index: {}]
  %s3 = inlined_call_operand.hbm [shape: f32[128,128], index: 3, kind: input, shape index: {}]
  %s4 = inlined_call_operand.hbm [shape: f32[128,128], index: 4, kind: output, shape index: {}]
  %s5 = sld [smem:[#allocation0]]
  $region57: #{tpu_custom_call.1} parent=0
    _
  %s7 = ssub.s32 1, %s5
  %s8 = scalar_select 0, %s7, %s5
  $region1: #{tpu_custom_call.1} parent=0
    #allocation2 [shape = 'u8[65536]{0}', space=vmem, size = 0x10000, scoped, tag = 'input window, operand 0']
    #allocation3 [shape = 's32[2]{0}', space=sflag, size = 0x8, scoped, tag = 'scoped memory for tpu_custom_call.1']
    #allocation4 [shape = 's32[2]{0}', space=sflag, size = 0x8, scoped, tag = 'scoped memory for tpu_custom_call.1']
    #allocation5 [shape = 'u8[65536]{0}', space=vmem, size = 0x10000, scoped, tag = 'input window, operand 3, single buffered']
    #allocation6 [shape = 's32[1]{0}', space=sflag, size = 0x4, scoped, tag = 'scoped memory for tpu_custom_call.1']
    #allocation7 [shape = 'u8[65536]{0}', space=vmem, size = 0x10000, scoped, tag = 'output window, operand 0']
    %9 = vsyncpa [#allocation3], 0
    %s10 = scalar_lea.sflag [#allocation3], 1
    %11 = vsyncpa %s10, 0
    %12 = vsyncpa [#allocation6], 0
    %13 = vsyncpa [#allocation4], 0
    %s14 = scalar_lea.sflag [#allocation4], 1
    %15 = vsyncpa %s14, 0
    loop: start=0, step=1, limit=4
    $region2: #{tpu_custom_call.1} parent=1 // loop_pre_header
      _
    $region3: #{tpu_custom_call.1} parent=1 // loop_header
      %s17 = sphi 0, %s21
      %p18 = scmp.ge.s32.totalorder %s17, 4
      %s27 = sphi 0, %s29
      %s30 = sphi 0, %s27
      %s31 = sphi 0, %s30
      %s47 = sphi 0, %s31
      %s51 = sphi 0, %s51
      %s53 = sphi 0, %s51
      %s54 = sphi 0, %s53
      %s68 = sphi 0, %s54
      %s72 = sphi 0, %s72
      %s74 = sphi 0, %s72
      %s75 = sphi 0, %s74
      %s89 = sphi 0, %s75
      %s93 = sphi 0, %s93
      %s95 = sphi 0, %s93
      %s96 = sphi 0, %s95
      %s110 = sphi 0, %s96
      %s116 = sphi 0, %s118
      %s119 = sphi 0, %s116
      %s120 = sphi 0, %s119
      %s136 = sphi 0, %s120
    $region4: #{tpu_custom_call.1} parent=1 // loop_header_branch
      %20 = sbr.rel (%p18) target = $region8
    $region5: #{tpu_custom_call.1} parent=1 // loop_body
      %s22 = ssub.s32 %s17, 1
      %s23 = ssub.s32 %s17, 2
      %s24 = sadd.s32 %s17, 1
      %s25 = ssub.s32 %s17, %s24
      %p26 = scmp.eq.s32.totalorder %s25, 0
      %s28 = sadd.s32 %s27, 1
      %s29 = scalar_select %p26, %s27, %s28
      %p32 = pneg %p26
      %p33 = scmp.eq.s32.totalorder %s17, 1
      %p34 = por %p32, %p33
      %p35 = scmp.ne.s32.totalorder %s27, %s30
      %p36 = scmp.eq.s32.totalorder %s17, 0
      %p37 = por %p35, %p36
      %p38 = scmp.ne.s32.totalorder %s27, %s30
      %p39 = scmp.eq.s32.totalorder %s22, 1
      %p40 = por %p38, %p39
      %p41 = scmp.ne.s32.totalorder %s30, %s31
      %p42 = scmp.eq.s32.totalorder %s22, 0
      %p43 = por %p41, %p42
      %p44 = scmp.ne.s32.totalorder %s30, %s31
      %p45 = scmp.eq.s32.totalorder %s23, 1
      %p46 = por %p44, %p45
      %p48 = scmp.ne.s32.totalorder %s31, %s47
      %p49 = scmp.eq.s32.totalorder %s23, 0
      %p50 = por %p48, %p49
      %s52 = sadd.s32 %s51, 1
      %p55 = scmp.eq.s32.totalorder %s17, 1
      %p56 = scmp.ne.s32.totalorder %s51, %s53
      %p57 = scmp.eq.s32.totalorder %s17, 0
      %p58 = por %p56, %p57
      %p59 = scmp.ne.s32.totalorder %s51, %s53
      %p60 = scmp.eq.s32.totalorder %s22, 1
      %p61 = por %p59, %p60
      %p62 = scmp.ne.s32.totalorder %s53, %s54
      %p63 = scmp.eq.s32.totalorder %s22, 0
      %p64 = por %p62, %p63
      %p65 = scmp.ne.s32.totalorder %s53, %s54
      %p66 = scmp.eq.s32.totalorder %s23, 1
      %p67 = por %p65, %p66
      %p69 = scmp.ne.s32.totalorder %s54, %s68
      %p70 = scmp.eq.s32.totalorder %s23, 0
      %p71 = por %p69, %p70
      %s73 = sadd.s32 %s72, 1
      %p76 = scmp.eq.s32.totalorder %s17, 1
      %p77 = scmp.ne.s32.totalorder %s72, %s74
      %p78 = scmp.eq.s32.totalorder %s17, 0
      %p79 = por %p77, %p78
      %p80 = scmp.ne.s32.totalorder %s72, %s74
      %p81 = scmp.eq.s32.totalorder %s22, 1
      %p82 = por %p80, %p81
      %p83 = scmp.ne.s32.totalorder %s74, %s75
      %p84 = scmp.eq.s32.totalorder %s22, 0
      %p85 = por %p83, %p84
      %p86 = scmp.ne.s32.totalorder %s74, %s75
      %p87 = scmp.eq.s32.totalorder %s23, 1
      %p88 = por %p86, %p87
      %p90 = scmp.ne.s32.totalorder %s75, %s89
      %p91 = scmp.eq.s32.totalorder %s23, 0
      %p92 = por %p90, %p91
      %s94 = sadd.s32 %s93, 1
      %p97 = scmp.eq.s32.totalorder %s17, 1
      %p98 = scmp.ne.s32.totalorder %s93, %s95
      %p99 = scmp.eq.s32.totalorder %s17, 0
      %p100 = por %p98, %p99
      %p101 = scmp.ne.s32.totalorder %s93, %s95
      %p102 = scmp.eq.s32.totalorder %s22, 1
      %p103 = por %p101, %p102
      %p104 = scmp.ne.s32.totalorder %s95, %s96
      %p105 = scmp.eq.s32.totalorder %s22, 0
      %p106 = por %p104, %p105
      %p107 = scmp.ne.s32.totalorder %s95, %s96
      %p108 = scmp.eq.s32.totalorder %s23, 1
      %p109 = por %p107, %p108
      %p111 = scmp.ne.s32.totalorder %s96, %s110
      %p112 = scmp.eq.s32.totalorder %s23, 0
      %p113 = por %p111, %p112
      %s114 = ssub.s32 %s17, %s24
      %p115 = scmp.eq.s32.totalorder %s114, 0
      %s117 = sadd.s32 %s116, 1
      %s118 = scalar_select %p115, %s116, %s117
      %p121 = pneg %p115
      %p122 = scmp.eq.s32.totalorder %s17, 1
      %p123 = por %p121, %p122
      %p124 = scmp.ne.s32.totalorder %s116, %s119
      %p125 = scmp.eq.s32.totalorder %s17, 0
      %p126 = por %p124, %p125
      %p127 = scmp.ne.s32.totalorder %s116, %s119
      %p128 = scmp.eq.s32.totalorder %s22, 1
      %p129 = por %p127, %p128
      %p130 = scmp.ne.s32.totalorder %s119, %s120
      %p131 = scmp.eq.s32.totalorder %s22, 0
      %p132 = por %p130, %p131
      %p133 = scmp.ne.s32.totalorder %s119, %s120
      %p134 = scmp.eq.s32.totalorder %s23, 1
      %p135 = por %p133, %p134
      %p137 = scmp.ne.s32.totalorder %s120, %s136
      %p138 = scmp.eq.s32.totalorder %s23, 0
      %p139 = por %p137, %p138
      %p140 = scmp.le.s32.totalorder 1, %s17
      %p141 = scmp.lt.s32.totalorder %s17, 3
      %p142 = pnand %p140, %p141
      %p143 = pneg %p142
      // Predicated region
      $region9: #{tpu_custom_call.1} parent=5 // pred_check
        _
      $region10: #{tpu_custom_call.1} parent=5 // pred_check_branch
        %145 = sbr.rel (%p142) target = $region12
      $region11: #{tpu_custom_call.1} parent=5 // pred_region
        %s146 = ssub.s32 %s17, 1
        // Predicated region
        $region13: #{tpu_custom_call.1} parent=11 // pred_check
          %p147 = pneg %p64
        $region14: #{tpu_custom_call.1} parent=11 // pred_check_branch
          %149 = sbr.rel (%p147) target = $region16
        $region15: #{tpu_custom_call.1} parent=11 // pred_region
          _
        $region16: #{tpu_custom_call.1} parent=11 // pred_fallthru
          _
        // Predicated region
        $region17: #{tpu_custom_call.1} parent=11 // pred_check
          %p150 = pneg %p85
        $region18: #{tpu_custom_call.1} parent=11 // pred_check_branch
          %152 = sbr.rel (%p150) target = $region20
        $region19: #{tpu_custom_call.1} parent=11 // pred_region
          _
        $region20: #{tpu_custom_call.1} parent=11 // pred_fallthru
          _
        // Predicated region
        $region21: #{tpu_custom_call.1} parent=11 // pred_check
          %p153 = pneg %p106
        $region22: #{tpu_custom_call.1} parent=11 // pred_check_branch
          %155 = sbr.rel (%p153) target = $region24
        $region23: #{tpu_custom_call.1} parent=11 // pred_region
          %s157 = ssub.s32 2048, 2048
          %158 = vsyncadd [#allocation6], %s157
          %s159 = sshll.u32 [#allocation5], 4
          %s160 = int_to_ptr.vmem [resolvable:$true] %s159
          %165 = dma.hbm_to_vmem [thread:$0]  %s3, 2048, %s160, [#allocation6], 128, 128, 8
        $region24: #{tpu_custom_call.1} parent=11 // pred_fallthru
          _
      $region12: #{tpu_custom_call.1} parent=5 // pred_fallthru
        _
      %p166 = scmp.lt.s32.totalorder %s17, 2
      // Predicated region
      $region25: #{tpu_custom_call.1} parent=5 // pred_check
        %p167 = pneg %p166
      $region26: #{tpu_custom_call.1} parent=5 // pred_check_branch
        %169 = sbr.rel (%p167) target = $region28
      $region27: #{tpu_custom_call.1} parent=5 // pred_region
        // Predicated region
        $region29: #{tpu_custom_call.1} parent=27 // pred_check
          %p170 = pneg %p37
        $region30: #{tpu_custom_call.1} parent=27 // pred_check_branch
          %172 = sbr.rel (%p170) target = $region32
        $region31: #{tpu_custom_call.1} parent=27 // pred_region
          %s173 = sand.u32 %s27, 1
          %s174 = scalar_lea.sflag [#allocation3], %s173
          %s175 = sand.u32 %s27, 1
          %s176 = smul.addr %s175, 64
          %s177 = scalar_lea.vmem [#allocation2], %s176
          %s178 = smul.u32 8, %s17
          %s180 = ssub.s32 1024, 1024
          %181 = vsyncadd %s174, %s180
          %s182 = smul.addr %s178, 128
          %s183 = scalar_lea.hbm %s0, %s182
          %s184 = sshll.u32 %s177, 4
          %s185 = int_to_ptr.vmem [resolvable:$true] %s184
          %190 = dma.hbm_to_vmem [thread:$0]  %s183, 1024, %s185, %s174, 128, 128, 8
        $region32: #{tpu_custom_call.1} parent=27 // pred_fallthru
          _
      $region28: #{tpu_custom_call.1} parent=5 // pred_fallthru
        _
      %p191 = scmp.le.s32.totalorder 1, %s17
      %p192 = scmp.lt.s32.totalorder %s17, 3
      %p193 = pnand %p191, %p192
      %p194 = pneg %p193
      // Predicated region
      $region33: #{tpu_custom_call.1} parent=5 // pred_check
        _
      $region34: #{tpu_custom_call.1} parent=5 // pred_check_branch
        %196 = sbr.rel (%p193) target = $region36
      $region35: #{tpu_custom_call.1} parent=5 // pred_region
        %s197 = ssub.s32 %s17, 1
        %s198 = sand.u32 %s30, 1
        %s199 = scalar_lea.sflag [#allocation3], %s198
        %s200 = sand.u32 %s30, 1
        %s201 = smul.addr %s200, 64
        %s202 = scalar_lea.vmem [#allocation2], %s201
        // Predicated region
        $region37: #{tpu_custom_call.1} parent=35 // pred_check
          %p203 = pneg %p43
        $region38: #{tpu_custom_call.1} parent=35 // pred_check_branch
          %205 = sbr.rel (%p203) target = $region40
        $region39: #{tpu_custom_call.1} parent=35 // pred_region
          %206 = dma.done %s199, 1024
        $region40: #{tpu_custom_call.1} parent=35 // pred_fallthru
          _
        // Predicated region
        $region41: #{tpu_custom_call.1} parent=35 // pred_check
          %p207 = pneg %p106
        $region42: #{tpu_custom_call.1} parent=35 // pred_check_branch
          %209 = sbr.rel (%p207) target = $region44
        $region43: #{tpu_custom_call.1} parent=35 // pred_region
          %210 = dma.done [#allocation6], 2048
        $region44: #{tpu_custom_call.1} parent=35 // pred_fallthru
          _
        %s211 = sand.u32 %s30, 1
        %s212 = scalar_lea.sflag [#allocation3], %s211
        %s213 = sand.u32 %s30, 1
        %s214 = smul.addr %s213, 64
        %s215 = scalar_lea.vmem [#allocation2], %s214
        %p216 = pneg %p43
        %p217 = pneg %p40
        %p218 = pneg %p64
        %p219 = pneg %p61
        %p220 = pneg %p85
        %p221 = pneg %p82
        %p222 = pneg %p106
        %p223 = pneg %p103
        %p224 = pneg %p132
        %p225 = pneg %p129
        %s226 = sand.u32 %s119, 1
        %s227 = scalar_lea.sflag [#allocation4], %s226
        %s228 = sand.u32 %s119, 1
        %s229 = smul.addr %s228, 64
        %s230 = scalar_lea.vmem [#allocation7], %s229
        %s231 = smul.u32 8, %s22
        %s232 = smul.u32 8, %s22
        %v233 = vld [vmem:[%s202] sm:$0xff]
        %v234 = vld [vmem:[%s202 + $0x8] sm:$0xff]
        %v235 = vld [vmem:[%s202 + $0x10] sm:$0xff]
        %v236 = vld [vmem:[%s202 + $0x18] sm:$0xff]
        %v237 = vld [vmem:[%s202 + $0x20] sm:$0xff]
        %v238 = vld [vmem:[%s202 + $0x28] sm:$0xff]
        %v239 = vld [vmem:[%s202 + $0x30] sm:$0xff]
        %v240 = vld [vmem:[%s202 + $0x38] sm:$0xff]
        %241 = vadd.xlane.f32.xlu0 %v233
        %v242 = vpop.xlane.xlu0 %241
        %243 = vadd.xlane.f32.xlu0 %v234
        %v244 = vpop.xlane.xlu0 %243
        %245 = vadd.xlane.f32.xlu0 %v235
        %v246 = vpop.xlane.xlu0 %245
        %247 = vadd.xlane.f32.xlu0 %v236
        %v248 = vpop.xlane.xlu0 %247
        %249 = vadd.xlane.f32.xlu0 %v237
        %v250 = vpop.xlane.xlu0 %249
        %251 = vadd.xlane.f32.xlu0 %v238
        %v252 = vpop.xlane.xlu0 %251
        %253 = vadd.xlane.f32.xlu0 %v239
        %v254 = vpop.xlane.xlu0 %253
        %255 = vadd.xlane.f32.xlu0 %v240
        %v256 = vpop.xlane.xlu0 %255
        %v257 = vrcp.pop 128.0
        %v258 = vmul.f32 %v242, %v257
        %v259 = vmul.f32 %v244, %v257
        %v260 = vmul.f32 %v246, %v257
        %v261 = vmul.f32 %v248, %v257
        %v262 = vmul.f32 %v250, %v257
        %v263 = vmul.f32 %v252, %v257
        %v264 = vmul.f32 %v254, %v257
        %v265 = vmul.f32 %v256, %v257
        %v266 = vsub.f32 %v233, %v258
        %v267 = vsub.f32 %v234, %v259
        %v268 = vsub.f32 %v235, %v260
        %v269 = vsub.f32 %v236, %v261
        %v270 = vsub.f32 %v237, %v262
        %v271 = vsub.f32 %v238, %v263
        %v272 = vsub.f32 %v239, %v264
        %v273 = vsub.f32 %v240, %v265
        %v274 = vmul.f32 %v266, %v266
        %v275 = vmul.f32 %v267, %v267
        %v276 = vmul.f32 %v268, %v268
        %v277 = vmul.f32 %v269, %v269
        %v278 = vmul.f32 %v270, %v270
        %v279 = vmul.f32 %v271, %v271
        %v280 = vmul.f32 %v272, %v272
        %v281 = vmul.f32 %v273, %v273
        %282 = vadd.xlane.f32.xlu0 %v274
        %v283 = vpop.xlane.xlu0 %282
        %284 = vadd.xlane.f32.xlu0 %v275
        %v285 = vpop.xlane.xlu0 %284
        %286 = vadd.xlane.f32.xlu0 %v276
        %v287 = vpop.xlane.xlu0 %286
        %288 = vadd.xlane.f32.xlu0 %v277
        %v289 = vpop.xlane.xlu0 %288
        %290 = vadd.xlane.f32.xlu0 %v278
        %v291 = vpop.xlane.xlu0 %290
        %292 = vadd.xlane.f32.xlu0 %v279
        %v293 = vpop.xlane.xlu0 %292
        %294 = vadd.xlane.f32.xlu0 %v280
        %v295 = vpop.xlane.xlu0 %294
        %296 = vadd.xlane.f32.xlu0 %v281
        %v297 = vpop.xlane.xlu0 %296
        %v298 = vmul.f32 %v283, %v257
        %v299 = vmul.f32 %v285, %v257
        %v300 = vmul.f32 %v287, %v257
        %v301 = vmul.f32 %v289, %v257
        %v302 = vmul.f32 %v291, %v257
        %v303 = vmul.f32 %v293, %v257
        %v304 = vmul.f32 %v295, %v257
        %v305 = vmul.f32 %v297, %v257
        %v306 = vadd.f32 %v298, 1e-05
        %v307 = vadd.f32 %v299, 1e-05
        %v308 = vadd.f32 %v300, 1e-05
        %v309 = vadd.f32 %v301, 1e-05
        %v310 = vadd.f32 %v302, 1e-05
        %v311 = vadd.f32 %v303, 1e-05
        %v312 = vadd.f32 %v304, 1e-05
        %v313 = vadd.f32 %v305, 1e-05
        %v314 = vrsqrt.pop %v306
        %v315 = vrsqrt.pop %v307
        %v316 = vrsqrt.pop %v308
        %v317 = vrsqrt.pop %v309
        %v318 = vrsqrt.pop %v310
        %v319 = vrsqrt.pop %v311
        %v320 = vrsqrt.pop %v312
        %v321 = vrsqrt.pop %v313
        %v322 = vmul.f32 %v266, %v314
        %v323 = vmul.f32 %v267, %v315
        %v324 = vmul.f32 %v268, %v316
        %v325 = vmul.f32 %v269, %v317
        %v326 = vmul.f32 %v270, %v318
        %v327 = vmul.f32 %v271, %v319
        %v328 = vmul.f32 %v272, %v320
        %v329 = vmul.f32 %v273, %v321
        %v330 = vld [vmem:[%s1] sm:$0x1]
        %v332 = vlaneseq
        %v333 = vshrl.u32 %v332, 7
        %v334 = vsub.s32 0, %v333
        %v335 = vrot.slane %v330, %v334
        %v337 = vmul.f32 %v322, %v335
        %v338 = vmul.f32 %v323, %v335
        %v339 = vmul.f32 %v324, %v335
        %v340 = vmul.f32 %v325, %v335
        %v341 = vmul.f32 %v326, %v335
        %v342 = vmul.f32 %v327, %v335
        %v343 = vmul.f32 %v328, %v335
        %v344 = vmul.f32 %v329, %v335
        %v345 = vld [vmem:[%s2] sm:$0x1]
        %v347 = vlaneseq
        %v348 = vshrl.u32 %v347, 7
        %v349 = vsub.s32 0, %v348
        %v350 = vrot.slane %v345, %v349
        %v352 = vadd.f32 %v337, %v350
        %v353 = vadd.f32 %v338, %v350
        %v354 = vadd.f32 %v339, %v350
        %v355 = vadd.f32 %v340, %v350
        %v356 = vadd.f32 %v341, %v350
        %v357 = vadd.f32 %v342, %v350
        %v358 = vadd.f32 %v343, %v350
        %v359 = vadd.f32 %v344, %v350
        %v360 = vld [vmem:[#allocation5] sm:$0xff]
        %v361 = vld [vmem:[#allocation5 + $0x8] sm:$0xff]
        %v362 = vld [vmem:[#allocation5 + $0x10] sm:$0xff]
        %v363 = vld [vmem:[#allocation5 + $0x18] sm:$0xff]
        %v364 = vld [vmem:[#allocation5 + $0x20] sm:$0xff]
        %v365 = vld [vmem:[#allocation5 + $0x28] sm:$0xff]
        %v366 = vld [vmem:[#allocation5 + $0x30] sm:$0xff]
        %v367 = vld [vmem:[#allocation5 + $0x38] sm:$0xff]
        %v368 = vld [vmem:[#allocation5 + $0x40] sm:$0xff]
        %v369 = vld [vmem:[#allocation5 + $0x48] sm:$0xff]
        %v370 = vld [vmem:[#allocation5 + $0x50] sm:$0xff]
        %v371 = vld [vmem:[#allocation5 + $0x58] sm:$0xff]
        %v372 = vld [vmem:[#allocation5 + $0x60] sm:$0xff]
        %v373 = vld [vmem:[#allocation5 + $0x68] sm:$0xff]
        %v374 = vld [vmem:[#allocation5 + $0x70] sm:$0xff]
        %v375 = vld [vmem:[#allocation5 + $0x78] sm:$0xff]
        %376 = vmatprep.subr.mxu0 0.0
        %377 = vmatpush1.msra.mxu0 %v375
        %378 = vmatprep.subr.mxu0 0.0
        %379 = vmatpush1.msra.mxu0 %v374
        %380 = vmatprep.subr.mxu0 0.0
        %381 = vmatpush1.msra.mxu0 %v373
        %382 = vmatprep.subr.mxu0 0.0
        %383 = vmatpush1.msra.mxu0 %v372
        %384 = vmatprep.subr.mxu0 0.0
        %385 = vmatpush1.msra.mxu0 %v371
        %386 = vmatprep.subr.mxu0 0.0
        %387 = vmatpush1.msra.mxu0 %v370
        %388 = vmatprep.subr.mxu0 0.0
        %389 = vmatpush1.msra.mxu0 %v369
        %390 = vmatprep.subr.mxu0 0.0
        %391 = vmatpush1.msra.mxu0 %v368
        %392 = vmatprep.subr.mxu0 0.0
        %393 = vmatpush1.msra.mxu0 %v367
        %394 = vmatprep.subr.mxu0 0.0
        %395 = vmatpush1.msra.mxu0 %v366
        %396 = vmatprep.subr.mxu0 0.0
        %397 = vmatpush1.msra.mxu0 %v365
        %398 = vmatprep.subr.mxu0 0.0
        %399 = vmatpush1.msra.mxu0 %v364
        %400 = vmatprep.subr.mxu0 0.0
        %401 = vmatpush1.msra.mxu0 %v363
        %402 = vmatprep.subr.mxu0 0.0
        %403 = vmatpush1.msra.mxu0 %v362
        %404 = vmatprep.subr.mxu0 0.0
        %405 = vmatpush1.msra.mxu0 %v361
        %406 = vmatprep.subr.mxu0 0.0
        %407 = vmatpush1.msra.mxu0 %v360
        %408 = vmatprep.subr.mxu0 0.0
        %409 = vmatpush2.msra.mxu0 0.0
        %410 = vmatprep.subr.mxu0 0.0
        %411 = vmatpush2.msra.mxu0 0.0
        %412 = vmatprep.subr.mxu0 0.0
        %413 = vmatpush2.msra.mxu0 0.0
        %414 = vmatprep.subr.mxu0 0.0
        %415 = vmatpush2.msra.mxu0 0.0
        %416 = vmatprep.subr.mxu0 0.0
        %417 = vmatpush2.msra.mxu0 0.0
        %418 = vmatprep.subr.mxu0 0.0
        %419 = vmatpush2.msra.mxu0 0.0
        %420 = vmatprep.subr.mxu0 0.0
        %421 = vmatpush2.msra.mxu0 0.0
        %422 = vmatprep.subr.mxu0 0.0
        %423 = vmatpush2.msra.mxu0 0.0
        %424 = vmatprep.subr.mxu0 0.0
        %425 = vmatpush2.msra.mxu0 0.0
        %426 = vmatprep.subr.mxu0 0.0
        %427 = vmatpush2.msra.mxu0 0.0
        %428 = vmatprep.subr.mxu0 0.0
        %429 = vmatpush2.msra.mxu0 0.0
        %430 = vmatprep.subr.mxu0 0.0
        %431 = vmatpush2.msra.mxu0 0.0
        %432 = vmatprep.subr.mxu0 0.0
        %433 = vmatpush2.msra.mxu0 0.0
        %434 = vmatprep.subr.mxu0 0.0
        %435 = vmatpush2.msra.mxu0 0.0
        %436 = vmatprep.subr.mxu0 0.0
        %437 = vmatpush2.msra.mxu0 0.0
        %438 = vmatprep.subr.mxu0 0.0
        %439 = vmatpush2.msra.mxu0 0.0
        %440 = vmatprep.mubr.f32.mxu0 0.0
        %441 = vmatmul.mubr.f32.gmra.mxu0 %v352
        %v442 = vpop.f32.mrf.mxu0
        %v443 = vadd.f32 0.0, %v442
        %v444 = vpop.f32.mrf.mxu0
        %445 = vmatprep.mubr.f32.mxu0 0.0
        %446 = vmatmul.mubr.f32.gmra.mxu0 %v353
        %v447 = vpop.f32.mrf.mxu0
        %v448 = vadd.f32 0.0, %v447
        %v449 = vpop.f32.mrf.mxu0
        %450 = vmatprep.mubr.f32.mxu0 0.0
        %451 = vmatmul.mubr.f32.gmra.mxu0 %v354
        %v452 = vpop.f32.mrf.mxu0
        %v453 = vadd.f32 0.0, %v452
        %v454 = vpop.f32.mrf.mxu0
        %455 = vmatprep.mubr.f32.mxu0 0.0
        %456 = vmatmul.mubr.f32.gmra.mxu0 %v355
        %v457 = vpop.f32.mrf.mxu0
        %v458 = vadd.f32 0.0, %v457
        %v459 = vpop.f32.mrf.mxu0
        %460 = vmatprep.mubr.f32.mxu0 0.0
        %461 = vmatmul.mubr.f32.gmra.mxu0 %v356
        %v462 = vpop.f32.mrf.mxu0
        %v463 = vadd.f32 0.0, %v462
        %v464 = vpop.f32.mrf.mxu0
        %465 = vmatprep.mubr.f32.mxu0 0.0
        %466 = vmatmul.mubr.f32.gmra.mxu0 %v357
        %v467 = vpop.f32.mrf.mxu0
        %v468 = vadd.f32 0.0, %v467
        %v469 = vpop.f32.mrf.mxu0
        %470 = vmatprep.mubr.f32.mxu0 0.0
        %471 = vmatmul.mubr.f32.gmra.mxu0 %v358
        %v472 = vpop.f32.mrf.mxu0
        %v473 = vadd.f32 0.0, %v472
        %v474 = vpop.f32.mrf.mxu0
        %475 = vmatprep.mubr.f32.mxu0 0.0
        %476 = vmatmul.mubr.f32.gmra.mxu0 %v359
        %v477 = vpop.f32.mrf.mxu0
        %v478 = vadd.f32 0.0, %v477
        %v479 = vpop.f32.mrf.mxu0
        %480 = vdwg.mxu0
        %481 = vst [vmem:[%s230] sm:$0xff] %v443
        %482 = vst [vmem:[%s230 + $0x8] sm:$0xff] %v448
        %483 = vst [vmem:[%s230 + $0x10] sm:$0xff] %v453
        %484 = vst [vmem:[%s230 + $0x18] sm:$0xff] %v458
        %485 = vst [vmem:[%s230 + $0x20] sm:$0xff] %v463
        %486 = vst [vmem:[%s230 + $0x28] sm:$0xff] %v468
        %487 = vst [vmem:[%s230 + $0x30] sm:$0xff] %v473
        %488 = vst [vmem:[%s230 + $0x38] sm:$0xff] %v478
        %s489 = sand.u32 %s119, 1
        %s490 = scalar_lea.sflag [#allocation4], %s489
        %s491 = sand.u32 %s119, 1
        %s492 = smul.addr %s491, 64
        %s493 = scalar_lea.vmem [#allocation7], %s492
        // Predicated region
        $region45: #{tpu_custom_call.1} parent=35 // pred_check
          %p494 = pneg %p129
        $region46: #{tpu_custom_call.1} parent=35 // pred_check_branch
          %496 = sbr.rel (%p494) target = $region48
        $region47: #{tpu_custom_call.1} parent=35 // pred_region
          %s497 = smul.u32 8, %s22
          %s499 = ssub.s32 1024, 1024
          %500 = vsyncadd %s490, %s499
          %s501 = smul.addr %s497, 128
          %s502 = scalar_lea.hbm %s4, %s501
          %s503 = sshll.u32 %s493, 4
          %s504 = int_to_ptr.vmem [resolvable:$true] %s503
          %509 = dma.vmem_to_hbm [thread:$0]  %s504, 1024, %s502, %s490, 128, 128, 8
        $region48: #{tpu_custom_call.1} parent=35 // pred_fallthru
          _
      $region36: #{tpu_custom_call.1} parent=5 // pred_fallthru
        _
      %p510 = scmp.le.s32.totalorder 2, %s17
      // Predicated region
      $region49: #{tpu_custom_call.1} parent=5 // pred_check
        %p511 = pneg %p510
      $region50: #{tpu_custom_call.1} parent=5 // pred_check_branch
        %513 = sbr.rel (%p511) target = $region52
      $region51: #{tpu_custom_call.1} parent=5 // pred_region
        %s514 = ssub.s32 %s17, 2
        // Predicated region
        $region53: #{tpu_custom_call.1} parent=51 // pred_check
          %p515 = pneg %p135
        $region54: #{tpu_custom_call.1} parent=51 // pred_check_branch
          %517 = sbr.rel (%p515) target = $region56
        $region55: #{tpu_custom_call.1} parent=51 // pred_region
          %s518 = sand.u32 %s120, 1
          %s519 = scalar_lea.sflag [#allocation4], %s518
          %s520 = sand.u32 %s120, 1
          %s521 = smul.addr %s520, 64
          %s522 = scalar_lea.vmem [#allocation7], %s521
          %523 = dma.done %s519, 1024
        $region56: #{tpu_custom_call.1} parent=51 // pred_fallthru
          _
      $region52: #{tpu_custom_call.1} parent=5 // pred_fallthru
        _
    $region6: #{tpu_custom_call.1} parent=1 // loop_footer
      %s21 = sadd.s32 1, %s17
    $region7: #{tpu_custom_call.1} parent=1 // loop_footer_branch
      %16 = sbr.rel target = $region3
    $region8: #{tpu_custom_call.1} parent=1 // loop_exit
      _
    %524 = vsyncpa [#allocation3], 1
    %s525 = scalar_lea.sflag [#allocation3], 1
    %526 = vsyncpa %s525, 1
    %527 = vsyncpa [#allocation6], 1
    %528 = vsyncpa [#allocation4], 1
    %s529 = scalar_lea.sflag [#allocation4], 1
    %530 = vsyncpa %s529, 1

</llo_original>
